<compile_context>
chip_gen: v6e
topology: v6e:2x2x1
jax: 0.10.0
libtpu: 0.0.40
codegen_flags: <defaults>
</compile_context>

<pallas_src>
import functools

import jax
import jax.numpy as jnp
from jax.experimental import pallas as pl
from jax.experimental.pallas import tpu as pltpu

DEFAULT_BF = 96.0
DEFAULT_DIST_LIST = [0.5, 1, 1.5, 2, 5, 10, 20, 30, 50, 100]

_LANES = 128
_ROW_ALIGN = 8                 # slab rows padded to a multiple of 8
_DEFAULT_MAX_TILE_ROWS = 2048  # 2048 x 128 x 4B = 1 MiB per f32 tile


def _cdiv(a, b):
    return -(-a // b)


def _round_up(x, m):
    return _cdiv(x, m) * m


def _tile_reduce8(x, tile_r):
    # (tile_r, 128) -> (8, 128) via vreg-wise adds (pure VPU, no XLU).
    return jnp.sum(x.reshape(tile_r // 8, 8, _LANES), axis=0)


def _valid_elements(tile_idx, n_elems, tile_r):
    # Flat-index mask: covers ragged last rows, lane-tail padding and fully
    # out-of-bounds (clamped) blocks.
    row0 = tile_idx * tile_r
    sub = jax.lax.broadcasted_iota(jnp.int32, (tile_r, _LANES), 0)
    lane = jax.lax.broadcasted_iota(jnp.int32, (tile_r, _LANES), 1)
    flat = (row0 + sub) * _LANES + lane
    return flat < n_elems


def _mae_sum_kernel(p_ref, t_ref, sum_ref, *, cmin, cmax, n_elems, tile_r,
                    tiles_per_split):
    i = pl.program_id(0)   # parallel split (per-TensorCore on v7x)
    j = pl.program_id(1)   # reduction step within the split

    @pl.when(j == 0)
    def _():
        sum_ref[...] = jnp.zeros_like(sum_ref)

    tile_idx = i * tiles_per_split + j
    valid = _valid_elements(tile_idx, n_elems, tile_r)

    p = p_ref[...].astype(jnp.float32)
    t = jnp.clip(t_ref[...].astype(jnp.float32), cmin, cmax)
    d = jnp.where(valid, jnp.abs(p - t), 0.0)

    sum_ref[...] += _tile_reduce8(d, tile_r)


def _mae_sum_masked_kernel(p_ref, t_ref, m_ref, sum_ref, cnt_ref, *, cmin,
                           cmax, n_elems, tile_r, tiles_per_split):
    i = pl.program_id(0)
    j = pl.program_id(1)

    @pl.when(j == 0)
    def _():
        sum_ref[...] = jnp.zeros_like(sum_ref)
        cnt_ref[...] = jnp.zeros_like(cnt_ref)

    tile_idx = i * tiles_per_split + j
    valid = _valid_elements(tile_idx, n_elems, tile_r)

    p = p_ref[...].astype(jnp.float32)
    t = jnp.clip(t_ref[...].astype(jnp.float32), cmin, cmax)
    keep = valid & (m_ref[...].astype(jnp.float32) != 0.0)

    d = jnp.where(keep, jnp.abs(p - t), 0.0)
    c = keep.astype(jnp.float32)

    sum_ref[...] += _tile_reduce8(d, tile_r)
    cnt_ref[...] += _tile_reduce8(c, tile_r)


class MAEMetricPallas:
    def __init__(self, bf=DEFAULT_BF, dist_list=DEFAULT_DIST_LIST,
                 max_tile_rows=_DEFAULT_MAX_TILE_ROWS):
        assert max_tile_rows % 32 == 0 and max_tile_rows >= 32
        self.bf = float(bf)
        inv = [float(bf) / float(d) for d in dist_list]
        self.clamp_min = float(min(inv))
        self.clamp_max = float(max(inv))
        self.max_tile_rows = int(max_tile_rows)

    def __call__(self, preds, target, valid_mask=None):
        preds = jnp.asarray(preds)
        target = jnp.asarray(target)

        n = int(preds.size)
        rows = _round_up(_cdiv(n, _LANES), _ROW_ALIGN)
        tile_r = min(self.max_tile_rows, rows)
        # Narrow-dtype streams (bf16 / int8) need tiles that are a multiple of
        # their native sublane tiling; for tiny inputs just use f32 streams.
        narrow_ok = (tile_r % 32 == 0)

        def to_stream(x):
            if x.dtype == jnp.bfloat16 and narrow_ok:
                return x                       # keep bf16 in HBM, upcast in-kernel
            if x.dtype != jnp.float32:
                x = x.astype(jnp.float32)
            return x

        preds = to_stream(preds)
        target = to_stream(target)

        pad = rows * _LANES - n

        def slab(x):
            x = x.reshape(-1)
            if pad:
                x = jnp.pad(x, (0, pad))        # small: at most 1023 elements
            return x.reshape(rows, _LANES)

        p2 = slab(preds)
        t2 = slab(target)

        num_tiles = _cdiv(rows, tile_r)
        num_splits = 2 if num_tiles >= 2 else 1
        tiles_per_split = _cdiv(num_tiles, num_splits)
        grid = (num_splits, tiles_per_split)

        def in_map(i, j):
            # Clamp the block index; over-range blocks are masked to zero
            # contribution inside the kernel via the flat-index mask.
            return (jnp.minimum(i * tiles_per_split + j, num_tiles - 1), 0)

        in_spec = pl.BlockSpec((tile_r, _LANES), in_map)
        out_spec = pl.BlockSpec((8, _LANES), lambda i, j: (i, 0))
        out_struct = jax.ShapeDtypeStruct((num_splits * 8, _LANES), jnp.float32)
        out_bytes = num_splits * 8 * _LANES * 4

        static = dict(cmin=self.clamp_min, cmax=self.clamp_max, n_elems=n,
                      tile_r=tile_r, tiles_per_split=tiles_per_split)
        compiler_params = pltpu.CompilerParams(
            dimension_semantics=("parallel", "arbitrary"))

        if valid_mask is None:
            kernel = functools.partial(_mae_sum_kernel, **static)
            cost = pl.CostEstimate(
                flops=8 * n, transcendentals=0,
                bytes_accessed=int(p2.nbytes + t2.nbytes + out_bytes))
            s = pl.pallas_call(
                kernel,
                out_shape=out_struct,
                grid_spec=pltpu.PrefetchScalarGridSpec(
                    num_scalar_prefetch=0,
                    grid=grid,
                    in_specs=[in_spec, in_spec],
                    out_specs=out_spec),
                compiler_params=compiler_params,
                cost_estimate=cost,
            )(p2, t2)
            total = jnp.sum(s)
            count = jnp.float32(n)
        else:
            mask = jnp.asarray(valid_mask)
            mask = mask.astype(jnp.int8 if narrow_ok else jnp.float32)
            m2 = slab(mask)
            kernel = functools.partial(_mae_sum_masked_kernel, **static)
            cost = pl.CostEstimate(
                flops=10 * n, transcendentals=0,
                bytes_accessed=int(p2.nbytes + t2.nbytes + m2.nbytes
                                   + 2 * out_bytes))
            s, c = pl.pallas_call(
                kernel,
                out_shape=(out_struct, out_struct),
                grid_spec=pltpu.PrefetchScalarGridSpec(
                    num_scalar_prefetch=0,
                    grid=grid,
                    in_specs=[in_spec, in_spec, in_spec],
                    out_specs=(out_spec, out_spec)),
                compiler_params=compiler_params,
                cost_estimate=cost,
            )(p2, t2, m2)
            total = jnp.sum(s)
            count = jnp.sum(c)

        # 1/bf factored out of the per-element math and applied once here.
        return (total / count / self.bf).astype(jnp.float32)


def _reference(preds, target, valid_mask, bf, cmin, cmax):
    p = jnp.asarray(preds, jnp.float32) / bf
    t = jnp.clip(jnp.asarray(target, jnp.float32), cmin, cmax) / bf
    d = jnp.abs(p - t)
    if valid_mask is None:
        return jnp.mean(d)
    m = jnp.asarray(valid_mask).astype(jnp.float32)
    return jnp.sum(d * m) / jnp.sum(m)


if __name__ == "__main__":
    key = jax.random.PRNGKey(0)

    def run_case(shape, dtype, max_tile_rows, use_mask, key):
        k1, k2, k3 = jax.random.split(key, 3)
        preds = jax.random.uniform(k1, shape, jnp.float32, 0.5, 200.0).astype(dtype)
        target = jax.random.uniform(k2, shape, jnp.float32, 0.5, 200.0).astype(dtype)
        mask = jax.random.bernoulli(k3, 0.8, shape) if use_mask else None

        metric = MAEMetricPallas(max_tile_rows=max_tile_rows)
        out = metric(preds, target, mask)
        ref = _reference(preds, target, mask, metric.bf,
                         metric.clamp_min, metric.clamp_max)
        jax.block_until_ready(out)
        assert jnp.allclose(out, ref, rtol=1e-5, atol=1e-6), (shape, dtype, out, ref)

    keys = jax.random.split(key, 8)

    # Primary case: NCHW inv-depth maps, masked and unmasked.
    run_case((2, 4, 16, 16), jnp.float32, _DEFAULT_MAX_TILE_ROWS, True, keys[0])
    run_case((2, 4, 16, 16), jnp.float32, _DEFAULT_MAX_TILE_ROWS, False, keys[1])

    # Ragged element count (n % 128 != 0) -> exercises pad + in-kernel masking.
    run_case((2, 3, 10, 13), jnp.float32, _DEFAULT_MAX_TILE_ROWS, True, keys[2])
    run_case((2, 3, 10, 13), jnp.float32, _DEFAULT_MAX_TILE_ROWS, False, keys[3])

    # Multi-tile / 2-way split / ragged last block / clamped block index path.
    run_case((2, 4, 40, 32), jnp.float32, 32, True, keys[4])
    run_case((2, 4, 40, 32), jnp.float32, 32, False, keys[5])

    # bf16 streams + int8 mask path.
    run_case((2, 4, 40, 32), jnp.bfloat16, 32, True, keys[6])

    print("KERNEL_OK")
</pallas_src>

<mosaic_0001>
module attributes {stable_mosaic.version = 11 : i64} {
  func.func @_mae_sum_masked_kernel(%arg0: i32, %arg1: i32, %arg2: memref<16x128xf32, #tpu.memory_space<vmem>>, %arg3: memref<16x128xf32, #tpu.memory_space<vmem>>, %arg4: memref<16x128xf32, #tpu.memory_space<vmem>>, %arg5: memref<8x128xf32, #tpu.memory_space<vmem>>, %arg6: memref<8x128xf32, #tpu.memory_space<vmem>>) attributes {dimension_semantics = [#tpu.dimension_semantics<parallel>, #tpu.dimension_semantics<arbitrary>], iteration_bounds = array<i64: 1, 1>, scalar_prefetch = 0 : i64, scratch_operands = 0 : i64, tpu.core_type = #tpu.core_type<tc>, window_params = [{transform_indices = @transform_0, window_bounds = array<i64: 16, 128>}, {transform_indices = @transform_1, window_bounds = array<i64: 16, 128>}, {transform_indices = @transform_2, window_bounds = array<i64: 16, 128>}, {transform_indices = @transform_3, window_bounds = array<i64: 8, 128>}, {transform_indices = @transform_4, window_bounds = array<i64: 8, 128>}]} {
    %c0_i32 = arith.constant 0 : i32
    %0 = arith.cmpi eq, %arg1, %c0_i32 : i32
    %1 = arith.extui %0 : i1 to i32
    %c0_i32_0 = arith.constant 0 : i32
    %2 = arith.cmpi ne, %1, %c0_i32_0 : i32
    scf.if %2 {
      %cst_19 = arith.constant 0.000000e+00 : f32
      %41 = vector.broadcast %cst_19 : f32 to vector<8x128xf32>
      %c0_20 = arith.constant 0 : index
      %c0_21 = arith.constant 0 : index
      %42 = vector.load %arg5[%c0_20, %c0_21] : memref<8x128xf32, #tpu.memory_space<vmem>>, vector<8x128xf32>
      tpu.vector_store %arg5[%c0_20, %c0_21], %41 {strides = array<i32>} : memref<8x128xf32, #tpu.memory_space<vmem>>, vector<8x128xf32>,
      %cst_22 = arith.constant 0.000000e+00 : f32
      %43 = vector.broadcast %cst_22 : f32 to vector<8x128xf32>
      %c0_23 = arith.constant 0 : index
      %c0_24 = arith.constant 0 : index
      %44 = vector.load %arg6[%c0_23, %c0_24] : memref<8x128xf32, #tpu.memory_space<vmem>>, vector<8x128xf32>
      tpu.vector_store %arg6[%c0_23, %c0_24], %43 {strides = array<i32>} : memref<8x128xf32, #tpu.memory_space<vmem>>, vector<8x128xf32>,
    } else {
    }
    %c1_i32 = arith.constant 1 : i32
    %3 = arith.muli %arg0, %c1_i32 : i32
    %4 = arith.addi %3, %arg1 : i32
    %c16_i32 = arith.constant 16 : i32
    %5 = arith.muli %4, %c16_i32 : i32
    %6 = tpu.iota {dimensions = array<i32: 0>} : vector<16x128xi32>
    %7 = tpu.iota {dimensions = array<i32: 1>} : vector<16x128xi32>
    %8 = vector.broadcast %5 : i32 to vector<16x128xi32>
    %9 = arith.addi %8, %6 : vector<16x128xi32>
    %c128_i32 = arith.constant 128 : i32
    %10 = vector.broadcast %c128_i32 : i32 to vector<16x128xi32>
    %11 = arith.muli %9, %10 : vector<16x128xi32>
    %12 = arith.addi %11, %7 : vector<16x128xi32>
    %c2048_i32 = arith.constant 2048 : i32
    %13 = vector.broadcast %c2048_i32 : i32 to vector<16x128xi32>
    %14 = arith.cmpi slt, %12, %13 : vector<16x128xi32>
    %c0 = arith.constant 0 : index
    %c0_1 = arith.constant 0 : index
    %15 = vector.load %arg2[%c0, %c0_1] : memref<16x128xf32, #tpu.memory_space<vmem>>, vector<16x128xf32>
    %c0_2 = arith.constant 0 : index
    %c0_3 = arith.constant 0 : index
    %16 = vector.load %arg3[%c0_2, %c0_3] : memref<16x128xf32, #tpu.memory_space<vmem>>, vector<16x128xf32>
    %cst = arith.constant 0.959999978 : f32
    %cst_4 = arith.constant 1.920000e+02 : f32
    %17 = vector.broadcast %cst : f32 to vector<16x128xf32>
    %18 = arith.maximumf %17, %16 : vector<16x128xf32>
    %19 = vector.broadcast %cst_4 : f32 to vector<16x128xf32>
    %20 = arith.minimumf %19, %18 : vector<16x128xf32>
    %c0_5 = arith.constant 0 : index
    %c0_6 = arith.constant 0 : index
    %21 = vector.load %arg4[%c0_5, %c0_6] : memref<16x128xf32, #tpu.memory_space<vmem>>, vector<16x128xf32>
    %cst_7 = arith.constant 0.000000e+00 : f32
    %22 = vector.broadcast %cst_7 : f32 to vector<16x128xf32>
    %23 = arith.cmpf one, %21, %22 : vector<16x128xf32>
    %24 = arith.andi %14, %23 : vector<16x128xi1>
    %25 = arith.subf %15, %20 : vector<16x128xf32>
    %26 = math.absf %25 : vector<16x128xf32>
    %cst_8 = arith.constant 0.000000e+00 : f32
    %27 = vector.broadcast %cst_8 : f32 to vector<16x128xf32>
    %28 = arith.select %24, %26, %27 : vector<16x128xi1>, vector<16x128xf32>
    %29 = arith.extui %24 : vector<16x128xi1> to vector<16x128xi32>
    %30 = arith.sitofp %29 : vector<16x128xi32> to vector<16x128xf32>
    %c0_9 = arith.constant 0 : index
    %c0_10 = arith.constant 0 : index
    %31 = vector.load %arg5[%c0_9, %c0_10] : memref<8x128xf32, #tpu.memory_space<vmem>>, vector<8x128xf32>
    %32 = vector.shape_cast %28 : vector<16x128xf32> to vector<2x8x128xf32>
    %cst_11 = arith.constant dense<0.000000e+00> : vector<8x128xf32>
    %33 = vector.multi_reduction <add>, %32, %cst_11 [0] : vector<2x8x128xf32> to vector<8x128xf32>
    %34 = arith.addf %31, %33 : vector<8x128xf32>
    %c0_12 = arith.constant 0 : index
    %c0_13 = arith.constant 0 : index
    %35 = vector.load %arg5[%c0_12, %c0_13] : memref<8x128xf32, #tpu.memory_space<vmem>>, vector<8x128xf32>
    tpu.vector_store %arg5[%c0_12, %c0_13], %34 {strides = array<i32>} : memref<8x128xf32, #tpu.memory_space<vmem>>, vector<8x128xf32>,
    %c0_14 = arith.constant 0 : index
    %c0_15 = arith.constant 0 : index
    %36 = vector.load %arg6[%c0_14, %c0_15] : memref<8x128xf32, #tpu.memory_space<vmem>>, vector<8x128xf32>
    %37 = vector.shape_cast %30 : vector<16x128xf32> to vector<2x8x128xf32>
    %cst_16 = arith.constant dense<0.000000e+00> : vector<8x128xf32>
    %38 = vector.multi_reduction <add>, %37, %cst_16 [0] : vector<2x8x128xf32> to vector<8x128xf32>
    %39 = arith.addf %36, %38 : vector<8x128xf32>
    %c0_17 = arith.constant 0 : index
    %c0_18 = arith.constant 0 : index
    %40 = vector.load %arg6[%c0_17, %c0_18] : memref<8x128xf32, #tpu.memory_space<vmem>>, vector<8x128xf32>
    tpu.vector_store %arg6[%c0_17, %c0_18], %39 {strides = array<i32>} : memref<8x128xf32, #tpu.memory_space<vmem>>, vector<8x128xf32>,
    return
  }
  func.func @transform_0(%arg0: i32, %arg1: i32) -> (i32, i32) {
    %c1_i32 = arith.constant 1 : i32
    %0 = arith.muli %arg0, %c1_i32 : i32
    %1 = arith.addi %0, %arg1 : i32
    %c0_i32 = arith.constant 0 : i32
    %2 = arith.minsi %1, %c0_i32 : i32
    %c0_i32_0 = arith.constant 0 : i32
    %c0_i32_1 = arith.constant 0 : i32
    return %2, %c0_i32_0 : i32, i32
  }
  func.func @transform_1(%arg0: i32, %arg1: i32) -> (i32, i32) {
    %c1_i32 = arith.constant 1 : i32
    %0 = arith.muli %arg0, %c1_i32 : i32
    %1 = arith.addi %0, %arg1 : i32
    %c0_i32 = arith.constant 0 : i32
    %2 = arith.minsi %1, %c0_i32 : i32
    %c0_i32_0 = arith.constant 0 : i32
    %c0_i32_1 = arith.constant 0 : i32
    return %2, %c0_i32_0 : i32, i32
  }
  func.func @transform_2(%arg0: i32, %arg1: i32) -> (i32, i32) {
    %c1_i32 = arith.constant 1 : i32
    %0 = arith.muli %arg0, %c1_i32 : i32
    %1 = arith.addi %0, %arg1 : i32
    %c0_i32 = arith.constant 0 : i32
    %2 = arith.minsi %1, %c0_i32 : i32
    %c0_i32_0 = arith.constant 0 : i32
    %c0_i32_1 = arith.constant 0 : i32
    return %2, %c0_i32_0 : i32, i32
  }
  func.func @transform_3(%arg0: i32, %arg1: i32) -> (i32, i32) {
    %c0_i32 = arith.constant 0 : i32
    %c0_i32_0 = arith.constant 0 : i32
    return %arg0, %c0_i32 : i32, i32
  }
  func.func @transform_4(%arg0: i32, %arg1: i32) -> (i32, i32) {
    %c0_i32 = arith.constant 0 : i32
    %c0_i32_0 = arith.constant 0 : i32
    return %arg0, %c0_i32 : i32, i32
  }
}

</mosaic_0001>

<llo_original>
// kernel: tpu_custom_call.1
$region0: #{tpu_custom_call.1}
  #allocation0 [shape = 'u32[]', space=smem, size = 0x4, offset = 0x4, fixed_abs, tag = 'smem constant byte address 0x4 - core index']
  #allocation1 [shape = 'u32[144,128]{1,0:T(1,128)}', space=vmem, size = 0x12000, scoped, tag = 'internal scratch']
  %s0 = inlined_call_operand.hbm [shape: f32[16,128], index: 0, kind: input, shape index: {}]
  %s1 = inlined_call_operand.hbm [shape: f32[16,128], index: 1, kind: input, shape index: {}]
  %s2 = inlined_call_operand.hbm [shape: f32[16,128], index: 2, kind: input, shape index: {}]
  %s3 = inlined_call_operand.hbm [shape: f32[8,128], index: 3, kind: output, shape index: {0}]
  %s4 = inlined_call_operand.hbm [shape: f32[8,128], index: 4, kind: output, shape index: {1}]
  %5 = xla_tuple %s3, %s4
  %s6 = sld [smem:[#allocation0]]
  $region46: #{tpu_custom_call.1} parent=0
    _
  %s8 = ssub.s32 1, %s6
  %s9 = scalar_select 0, %s8, %s6
  $region1: #{tpu_custom_call.1} parent=0
    #allocation2 [shape = 'u8[8192]{0}', space=vmem, size = 0x2000, scoped, tag = 'input window, operand 0, single buffered']
    #allocation3 [shape = 's32[1]{0}', space=sflag, size = 0x4, scoped, tag = 'scoped memory for tpu_custom_call.1']
    #allocation4 [shape = 's32[1]{0}', space=sflag, size = 0x4, scoped, tag = 'scoped memory for tpu_custom_call.1']
    #allocation5 [shape = 'u8[8192]{0}', space=vmem, size = 0x2000, scoped, tag = 'input window, operand 1, single buffered']
    #allocation6 [shape = 's32[1]{0}', space=sflag, size = 0x4, scoped, tag = 'scoped memory for tpu_custom_call.1']
    #allocation7 [shape = 'u8[8192]{0}', space=vmem, size = 0x2000, scoped, tag = 'input window, operand 2, single buffered']
    #allocation8 [shape = 'u8[4096]{0}', space=vmem, size = 0x1000, scoped, tag = 'output window, operand 0, single buffered']
    #allocation9 [shape = 'u8[4096]{0}', space=vmem, size = 0x1000, scoped, tag = 'output window, operand 1, single buffered']
    #allocation10 [shape = 's32[1]{0}', space=sflag, size = 0x4, scoped, tag = 'scoped memory for tpu_custom_call.1']
    %10 = vsyncpa [#allocation3], 0
    %11 = vsyncpa [#allocation6], 0
    %12 = vsyncpa [#allocation4], 0
    %13 = vsyncpa [#allocation10], 0
    // Predicated region
    $region2: #{tpu_custom_call.1} parent=1 // pred_check
      _
    $region3: #{tpu_custom_call.1} parent=1 // pred_check_branch
      %15 = sbr.rel (0) target = $region5
    $region4: #{tpu_custom_call.1} parent=1 // pred_region
      %s16 = sadd.s32 0, 0
      %p17 = scmp.lt.s32.totalorder %s16, 0
      %s18 = scalar_select %p17, %s16, 0
      %s19 = smul.u32 2, %s18
      %s21 = ssub.s32 256, 256
      %22 = vsyncadd [#allocation3], %s21
      %s23 = smul.addr %s19, 128
      %s24 = scalar_lea.hbm %s0, %s23
      %s25 = sshll.u32 [#allocation2], 4
      %s26 = int_to_ptr.vmem [resolvable:$true] %s25
      %31 = dma.hbm_to_vmem [thread:$0]  %s24, 256, %s26, [#allocation3], 128, 128, 8
    $region5: #{tpu_custom_call.1} parent=1 // pred_fallthru
      _
    // Predicated region
    $region6: #{tpu_custom_call.1} parent=1 // pred_check
      _
    $region7: #{tpu_custom_call.1} parent=1 // pred_check_branch
      %33 = sbr.rel (0) target = $region9
    $region8: #{tpu_custom_call.1} parent=1 // pred_region
      %s34 = sadd.s32 0, 0
      %p35 = scmp.lt.s32.totalorder %s34, 0
      %s36 = scalar_select %p35, %s34, 0
      %s37 = smul.u32 2, %s36
      %s39 = ssub.s32 256, 256
      %40 = vsyncadd [#allocation6], %s39
      %s41 = smul.addr %s37, 128
      %s42 = scalar_lea.hbm %s1, %s41
      %s43 = sshll.u32 [#allocation5], 4
      %s44 = int_to_ptr.vmem [resolvable:$true] %s43
      %49 = dma.hbm_to_vmem [thread:$0]  %s42, 256, %s44, [#allocation6], 128, 128, 8
    $region9: #{tpu_custom_call.1} parent=1 // pred_fallthru
      _
    // Predicated region
    $region10: #{tpu_custom_call.1} parent=1 // pred_check
      _
    $region11: #{tpu_custom_call.1} parent=1 // pred_check_branch
      %51 = sbr.rel (0) target = $region13
    $region12: #{tpu_custom_call.1} parent=1 // pred_region
      %s52 = sadd.s32 0, 0
      %p53 = scmp.lt.s32.totalorder %s52, 0
      %s54 = scalar_select %p53, %s52, 0
      %s55 = smul.u32 2, %s54
      %s57 = ssub.s32 256, 256
      %58 = vsyncadd [#allocation6], %s57
      %s59 = smul.addr %s55, 128
      %s60 = scalar_lea.hbm %s2, %s59
      %s61 = sshll.u32 [#allocation7], 4
      %s62 = int_to_ptr.vmem [resolvable:$true] %s61
      %67 = dma.hbm_to_vmem [thread:$0]  %s60, 256, %s62, [#allocation6], 128, 128, 8
    $region13: #{tpu_custom_call.1} parent=1 // pred_fallthru
      _
    // Predicated region
    $region14: #{tpu_custom_call.1} parent=1 // pred_check
      _
    $region15: #{tpu_custom_call.1} parent=1 // pred_check_branch
      %69 = sbr.rel (0) target = $region17
    $region16: #{tpu_custom_call.1} parent=1 // pred_region
      %70 = dma.done [#allocation3], 256
    $region17: #{tpu_custom_call.1} parent=1 // pred_fallthru
      _
    // Predicated region
    $region18: #{tpu_custom_call.1} parent=1 // pred_check
      _
    $region19: #{tpu_custom_call.1} parent=1 // pred_check_branch
      %72 = sbr.rel (0) target = $region21
    $region20: #{tpu_custom_call.1} parent=1 // pred_region
      %73 = dma.done [#allocation6], 256
    $region21: #{tpu_custom_call.1} parent=1 // pred_fallthru
      _
    // Predicated region
    $region22: #{tpu_custom_call.1} parent=1 // pred_check
      _
    $region23: #{tpu_custom_call.1} parent=1 // pred_check_branch
      %75 = sbr.rel (0) target = $region25
    $region24: #{tpu_custom_call.1} parent=1 // pred_region
      %76 = dma.done [#allocation6], 256
    $region25: #{tpu_custom_call.1} parent=1 // pred_fallthru
      _
    %s77 = sadd.s32 0, 0
    %p78 = scmp.lt.s32.totalorder %s77, 0
    %s79 = scalar_select %p78, %s77, 0
    %s80 = smul.u32 2, %s79
    %s81 = sadd.s32 0, 0
    %p82 = scmp.lt.s32.totalorder %s81, 0
    %s83 = scalar_select %p82, %s81, 0
    %s84 = smul.u32 2, %s83
    %s85 = sadd.s32 0, 0
    %p86 = scmp.lt.s32.totalorder %s85, 0
    %s87 = scalar_select %p86, %s85, 0
    %s88 = smul.u32 2, %s87
    %p89 = scmp.eq.s32.totalorder 0, 0
    // Predicated region
    $region26: #{tpu_custom_call.1} parent=1 // pred_check
      %p90 = pneg %p89
    $region27: #{tpu_custom_call.1} parent=1 // pred_check_branch
      %92 = sbr.rel (%p90) target = $region29
    $region28: #{tpu_custom_call.1} parent=1 // pred_region
      %93 = vst [vmem:[#allocation8] sm:$0xff] 0.0
      %94 = vst [vmem:[#allocation9] sm:$0xff] 0.0
    $region29: #{tpu_custom_call.1} parent=1 // pred_fallthru
      _
    %s95 = sadd.s32 0, 0
    %s96 = smul.u32 %s95, 16
    %v97 = vlaneseq
    %v98 = vshrl.u32 %v97, 7
    %v99 = vadd.s32 %v98, 8
    %v100 = vlaneseq
    %v101 = vand.u32 %v100, 127
    %v102 = vstv %s96
    %v103 = vadd.s32 %v102, %v98
    %v104 = vadd.s32 %v102, %v99
    %v105 = vmul.u32 %v103, 128
    %v106 = vmul.u32 %v104, 128
    %v107 = vadd.s32 %v105, %v101
    %v108 = vadd.s32 %v106, %v101
    %vm109 = vcmp.lt.s32.totalorder %v107, 2048
    %vm110 = vcmp.lt.s32.totalorder %v108, 2048
    %v111 = vld [vmem:[#allocation2] sm:$0xff]
    %v112 = vld [vmem:[#allocation2 + $0x8] sm:$0xff]
    %v113 = vld [vmem:[#allocation5] sm:$0xff]
    %v114 = vld [vmem:[#allocation5 + $0x8] sm:$0xff]
    %v115 = vmax.f32 %v113, 0.96
    %v116 = vmax.f32 %v114, 0.96
    %v117 = vmin.f32 %v115, 192.0
    %v118 = vmin.f32 %v116, 192.0
    %v119 = vld [vmem:[#allocation7] sm:$0xff]
    %v120 = vld [vmem:[#allocation7 + $0x8] sm:$0xff]
    %vm121 = vcmp.ne.f32.partialorder %v119, 0.0
    %vm122 = vcmp.ne.f32.partialorder %v120, 0.0
    %vm123 = vmand %vm109, %vm121
    %vm124 = vmand %vm110, %vm122
    %v125 = vsub.f32 %v111, %v117
    %v126 = vsub.f32 %v112, %v118
    %v127 = vand.u32 2147483647, %v125
    %v128 = vand.u32 2147483647, %v126
    %v129 = vsel %vm123, %v127, 0.0
    %v130 = vsel %vm124, %v128, 0.0
    %v131 = vsel %vm123, 1, 0
    %v132 = vsel %vm124, 1, 0
    %v133 = vcvt.s32.f32 %v131
    %v134 = vcvt.s32.f32 %v132
    %v135 = vld [vmem:[#allocation8] sm:$0xff]
    %v136 = vadd.f32 %v129, %v130
    %v137 = vadd.f32 %v135, %v136
    %138 = vst [vmem:[#allocation8] sm:$0xff] %v137
    %v139 = vld [vmem:[#allocation9] sm:$0xff]
    %v140 = vadd.f32 %v133, %v134
    %v141 = vadd.f32 %v139, %v140
    %142 = vst [vmem:[#allocation9] sm:$0xff] %v141
    // Predicated region
    $region30: #{tpu_custom_call.1} parent=1 // pred_check
      _
    $region31: #{tpu_custom_call.1} parent=1 // pred_check_branch
      %144 = sbr.rel (0) target = $region33
    $region32: #{tpu_custom_call.1} parent=1 // pred_region
      %s146 = ssub.s32 128, 128
      %147 = vsyncadd [#allocation4], %s146
      %s149 = sshll.u32 [#allocation8], 4
      %s150 = int_to_ptr.vmem [resolvable:$true] %s149
      %152 = dma.vmem_to_hbm [thread:$0]  %s150, 128, %s3, [#allocation4]
    $region33: #{tpu_custom_call.1} parent=1 // pred_fallthru
      _
    // Predicated region
    $region34: #{tpu_custom_call.1} parent=1 // pred_check
      _
    $region35: #{tpu_custom_call.1} parent=1 // pred_check_branch
      %154 = sbr.rel (0) target = $region37
    $region36: #{tpu_custom_call.1} parent=1 // pred_region
      %s156 = ssub.s32 128, 128
      %157 = vsyncadd [#allocation10], %s156
      %s159 = sshll.u32 [#allocation9], 4
      %s160 = int_to_ptr.vmem [resolvable:$true] %s159
      %162 = dma.vmem_to_hbm [thread:$0]  %s160, 128, %s4, [#allocation10]
    $region37: #{tpu_custom_call.1} parent=1 // pred_fallthru
      _
    // Predicated region
    $region38: #{tpu_custom_call.1} parent=1 // pred_check
      _
    $region39: #{tpu_custom_call.1} parent=1 // pred_check_branch
      %164 = sbr.rel (0) target = $region41
    $region40: #{tpu_custom_call.1} parent=1 // pred_region
      %165 = dma.done [#allocation4], 128
    $region41: #{tpu_custom_call.1} parent=1 // pred_fallthru
      _
    // Predicated region
    $region42: #{tpu_custom_call.1} parent=1 // pred_check
      _
    $region43: #{tpu_custom_call.1} parent=1 // pred_check_branch
      %167 = sbr.rel (0) target = $region45
    $region44: #{tpu_custom_call.1} parent=1 // pred_region
      %168 = dma.done [#allocation10], 128
    $region45: #{tpu_custom_call.1} parent=1 // pred_fallthru
      _
    %169 = vsyncpa [#allocation3], 1
    %170 = vsyncpa [#allocation6], 1
    %171 = vsyncpa [#allocation4], 1
    %172 = vsyncpa [#allocation10], 1

</llo_original>
